<compile_context>
chip_gen: v7x
topology: tpu7x:2x2x1
jax: 0.10.0
libtpu: 0.0.40
codegen_flags: <defaults>
</compile_context>

<pallas_src>
import math

import jax
import jax.numpy as jnp
from jax.experimental import pallas as pl
from jax.experimental.pallas import tpu as pltpu


def _round_up(x, m):
    return (x + m - 1) // m * m


def _pick_tile(full, pref, align):
    """Largest align-multiple tile <= pref that divides `full`, else `full`."""
    if full <= pref:
        return full
    if full % align:
        return full
    t = (pref // align) * align
    while t > 0 and full % t:
        t -= align
    return t if t > 0 else full


# ---------------------------------------------------------------------------
# kernel: one (tm, tn) output tile, reduced over the K (in_dim) grid axis
# ---------------------------------------------------------------------------
def glu_kernel(x_ref, w_ref, b_ref, o_ref, acc_ref):
    # x_ref  : (tm, tk)        activation tile (bf16 matmul operand)
    # w_ref  : (2, tk, tn)     stacked [W; V] weight tile (leading-axis split)
    # b_ref  : (2, 1, tn)      stacked bias (f32)
    # o_ref  : (tm, tn)        output tile
    # acc_ref: (2, tm, tn) f32 W / V accumulators (persist across K steps)
    k = pl.program_id(2)

    @pl.when(k == 0)
    def _():
        acc_ref[...] = jnp.zeros_like(acc_ref)

    x = x_ref[...]
    acc_ref[0] += jnp.dot(x, w_ref[0], preferred_element_type=jnp.float32)
    acc_ref[1] += jnp.dot(x, w_ref[1], preferred_element_type=jnp.float32)

    @pl.when(k == pl.num_programs(2) - 1)
    def _():
        hw = acc_ref[0] + b_ref[0]               # f32 epilogue (VPU/EUP)
        hv = acc_ref[1] + b_ref[1]
        o_ref[...] = (hw * jax.nn.sigmoid(hv)).astype(o_ref.dtype)


# ---------------------------------------------------------------------------
# parameter packing (do once, not per forward call)
# ---------------------------------------------------------------------------
def glu_params(w_w, b_w, w_v, b_v, *, compute_dtype=jnp.bfloat16):
    """Stack the two Linear layers on a leading axis and pre-cast for the MXU."""
    w_stack = jnp.stack([w_w, w_v], axis=0).astype(compute_dtype)       # (2,K,N)
    b_stack = jnp.stack([b_w, b_v], axis=0)[:, None, :].astype(jnp.float32)  # (2,1,N)
    return w_stack, b_stack


# ---------------------------------------------------------------------------
# wrapper
# ---------------------------------------------------------------------------
def glu_forward(x, w_stack, b_stack, *, block_rows=512, block_n=256, block_k=512):
    """GLU forward. x: (..., in_dim); w_stack: (2, in_dim, out_dim); b_stack: (2,1,out_dim)."""
    in_dim = x.shape[-1]
    out_dim = w_stack.shape[-1]
    lead = x.shape[:-1]
    m = math.prod(lead) if lead else 1
    orig_dtype = x.dtype
    compute_dtype = w_stack.dtype

    xf = x.reshape(m, in_dim).astype(compute_dtype)

    # Tile selection: last dims must be 128-aligned or equal the full dim.
    tk = _pick_tile(in_dim, block_k, 128)
    tn = _pick_tile(out_dim, block_n, 128)
    tm = min(block_rows, _round_up(m, 8))
    m_pad = _round_up(m, tm)
    if m_pad != m:
        xf = jnp.pad(xf, ((0, m_pad - m), (0, 0)))

    grid = (m_pad // tm, out_dim // tn, in_dim // tk)

    # VMEM budget: 2x-buffered X / W / out + bias + f32 accumulator scratch.
    xb = jnp.dtype(compute_dtype).itemsize
    ob = jnp.dtype(orig_dtype).itemsize
    est = (2 * tm * tk * xb
           + 2 * 2 * tk * tn * xb
           + 2 * 2 * tn * 4
           + 2 * tm * tn * ob
           + 2 * tm * tn * 4)
    vmem_limit = int(min(max(2 * est, 32 << 20), 64 << 20))

    out = pl.pallas_call(
        glu_kernel,
        out_shape=jax.ShapeDtypeStruct((m_pad, out_dim), orig_dtype),
        grid=grid,
        in_specs=[
            pl.BlockSpec((tm, tk), lambda i, j, k: (i, k)),        # X rows
            pl.BlockSpec((2, tk, tn), lambda i, j, k: (0, k, j)),  # stacked W/V
            pl.BlockSpec((2, 1, tn), lambda i, j, k: (0, 0, j)),   # stacked bias
        ],
        out_specs=pl.BlockSpec((tm, tn), lambda i, j, k: (i, j)),
        scratch_shapes=[pltpu.VMEM((2, tm, tn), jnp.float32)],
        compiler_params=pltpu.CompilerParams(
            dimension_semantics=("parallel", "parallel", "arbitrary"),
            vmem_limit_bytes=vmem_limit),
    )(xf, w_stack, b_stack)

    return out[:m].reshape(*lead, out_dim)


# ---------------------------------------------------------------------------
# demo / validation
# ---------------------------------------------------------------------------
if __name__ == "__main__":
    B, S, IN_DIM, OUT_DIM = 2, 8, 32, 32
    key = jax.random.PRNGKey(0)
    kx, kw1, kb1, kw2, kb2 = jax.random.split(key, 5)

    bound = 1.0 / math.sqrt(IN_DIM)       # nn.Linear default init range
    x = jax.random.normal(kx, (B, S, IN_DIM), jnp.float32)
    w_w = jax.random.uniform(kw1, (IN_DIM, OUT_DIM), jnp.float32, -bound, bound)
    b_w = jax.random.uniform(kb1, (OUT_DIM,), jnp.float32, -bound, bound)
    w_v = jax.random.uniform(kw2, (IN_DIM, OUT_DIM), jnp.float32, -bound, bound)
    b_v = jax.random.uniform(kb2, (OUT_DIM,), jnp.float32, -bound, bound)

    # One-time parameter packing (stack + bf16 cast for the MXU).
    w_stack, b_stack = glu_params(w_w, b_w, w_v, b_v)

    out = glu_forward(x, w_stack, b_stack)
    out = jax.block_until_ready(out)

    # pure-JAX f32 reference mirroring the torch module
    ref = (x @ w_w + b_w) * jax.nn.sigmoid(x @ w_v + b_v)

    assert out.shape == (B, S, OUT_DIM)
    assert bool(jnp.all(jnp.isfinite(out)))
    # bf16 matmul operands => compare against the f32 reference with a
    # tolerance matching bf16 operand precision (f32 accumulation).
    assert bool(jnp.allclose(out, ref, atol=3e-2, rtol=3e-2)), (
        f"max abs diff = {float(jnp.max(jnp.abs(out - ref)))}")
    print("KERNEL_OK")
</pallas_src>

<mosaic_0001>
module attributes {stable_mosaic.version = 11 : i64} {
  func.func @glu_kernel(%arg0: i32, %arg1: i32, %arg2: i32, %arg3: memref<16x32xbf16, #tpu.memory_space<vmem>>, %arg4: memref<2x32x32xbf16, #tpu.memory_space<vmem>>, %arg5: memref<2x1x32xf32, #tpu.memory_space<vmem>>, %arg6: memref<16x32xf32, #tpu.memory_space<vmem>>, %arg7: memref<2x16x32xf32, #tpu.memory_space<vmem>>) attributes {dimension_semantics = [#tpu.dimension_semantics<parallel>, #tpu.dimension_semantics<parallel>, #tpu.dimension_semantics<arbitrary>], iteration_bounds = array<i64: 1, 1, 1>, scalar_prefetch = 0 : i64, scratch_operands = 1 : i64, tpu.core_type = #tpu.core_type<tc>, window_params = [{transform_indices = @transform_0, window_bounds = array<i64: 16, 32>}, {transform_indices = @transform_1, window_bounds = array<i64: 2, 32, 32>}, {transform_indices = @transform_2, window_bounds = array<i64: 2, 1, 32>}, {transform_indices = @transform_3, window_bounds = array<i64: 16, 32>}]} {
    %c0_i32 = arith.constant 0 : i32
    %0 = arith.cmpi eq, %arg2, %c0_i32 : i32
    %1 = arith.extui %0 : i1 to i32
    %c0_i32_0 = arith.constant 0 : i32
    %2 = arith.cmpi ne, %1, %c0_i32_0 : i32
    scf.if %2 {
      %cst_22 = arith.constant 0.000000e+00 : f32
      %25 = vector.broadcast %cst_22 : f32 to vector<2x16x32xf32>
      %c0_23 = arith.constant 0 : index
      %c0_24 = arith.constant 0 : index
      %c0_25 = arith.constant 0 : index
      %26 = vector.load %arg7[%c0_23, %c0_24, %c0_25] : memref<2x16x32xf32, #tpu.memory_space<vmem>>, vector<2x16x32xf32>
      tpu.vector_store %arg7[%c0_23, %c0_24, %c0_25], %25 {strides = array<i32>} : memref<2x16x32xf32, #tpu.memory_space<vmem>>, vector<2x16x32xf32>,
    } else {
    }
    %c0 = arith.constant 0 : index
    %c0_1 = arith.constant 0 : index
    %3 = vector.load %arg3[%c0, %c0_1] : memref<16x32xbf16, #tpu.memory_space<vmem>>, vector<16x32xbf16>
    %c0_2 = arith.constant 0 : index
    %c0_3 = arith.constant 0 : index
    %c0_4 = arith.constant 0 : index
    %4 = vector.load %arg7[%c0_2, %c0_3, %c0_4] : memref<2x16x32xf32, #tpu.memory_space<vmem>>, vector<1x16x32xf32>
    %5 = vector.shape_cast %4 : vector<1x16x32xf32> to vector<16x32xf32>
    %c0_5 = arith.constant 0 : index
    %c0_6 = arith.constant 0 : index
    %c0_7 = arith.constant 0 : index
    %6 = vector.load %arg4[%c0_5, %c0_6, %c0_7] : memref<2x32x32xbf16, #tpu.memory_space<vmem>>, vector<1x32x32xbf16>
    %7 = vector.shape_cast %6 : vector<1x32x32xbf16> to vector<32x32xbf16>
    %cst = arith.constant dense<0.000000e+00> : vector<16x32xf32>
    %8 = tpu.matmul %3, %7, %cst {dimension_numbers = #tpu.dot_dimension_numbers<[1], [0], [0], [1], [0, 0, 1, 1], [], []>} : vector<16x32xbf16>, vector<32x32xbf16>, vector<16x32xf32> -> vector<16x32xf32>
    %9 = arith.addf %5, %8 : vector<16x32xf32>
    %c0_8 = arith.constant 0 : index
    %c0_9 = arith.constant 0 : index
    %c0_10 = arith.constant 0 : index
    %10 = vector.load %arg7[%c0_8, %c0_9, %c0_10] : memref<2x16x32xf32, #tpu.memory_space<vmem>>, vector<1x16x32xf32>
    %11 = vector.shape_cast %10 : vector<1x16x32xf32> to vector<16x32xf32>
    %12 = vector.shape_cast %9 : vector<16x32xf32> to vector<1x16x32xf32>
    tpu.vector_store %arg7[%c0_8, %c0_9, %c0_10], %12 {strides = array<i32>} : memref<2x16x32xf32, #tpu.memory_space<vmem>>, vector<1x16x32xf32>,
    %c1 = arith.constant 1 : index
    %c0_11 = arith.constant 0 : index
    %c0_12 = arith.constant 0 : index
    %13 = vector.load %arg7[%c1, %c0_11, %c0_12] : memref<2x16x32xf32, #tpu.memory_space<vmem>>, vector<1x16x32xf32>
    %14 = vector.shape_cast %13 : vector<1x16x32xf32> to vector<16x32xf32>
    %c1_13 = arith.constant 1 : index
    %c0_14 = arith.constant 0 : index
    %c0_15 = arith.constant 0 : index
    %15 = vector.load %arg4[%c1_13, %c0_14, %c0_15] : memref<2x32x32xbf16, #tpu.memory_space<vmem>>, vector<1x32x32xbf16>
    %16 = vector.shape_cast %15 : vector<1x32x32xbf16> to vector<32x32xbf16>
    %cst_16 = arith.constant dense<0.000000e+00> : vector<16x32xf32>
    %17 = tpu.matmul %3, %16, %cst_16 {dimension_numbers = #tpu.dot_dimension_numbers<[1], [0], [0], [1], [0, 0, 1, 1], [], []>} : vector<16x32xbf16>, vector<32x32xbf16>, vector<16x32xf32> -> vector<16x32xf32>
    %18 = arith.addf %14, %17 : vector<16x32xf32>
    %c1_17 = arith.constant 1 : index
    %c0_18 = arith.constant 0 : index
    %c0_19 = arith.constant 0 : index
    %19 = vector.load %arg7[%c1_17, %c0_18, %c0_19] : memref<2x16x32xf32, #tpu.memory_space<vmem>>, vector<1x16x32xf32>
    %20 = vector.shape_cast %19 : vector<1x16x32xf32> to vector<16x32xf32>
    %21 = vector.shape_cast %18 : vector<16x32xf32> to vector<1x16x32xf32>
    tpu.vector_store %arg7[%c1_17, %c0_18, %c0_19], %21 {strides = array<i32>} : memref<2x16x32xf32, #tpu.memory_space<vmem>>, vector<1x16x32xf32>,
    %c0_i32_20 = arith.constant 0 : i32
    %22 = arith.cmpi eq, %arg2, %c0_i32_20 : i32
    %23 = arith.extui %22 : i1 to i32
    %c0_i32_21 = arith.constant 0 : i32
    %24 = arith.cmpi ne, %23, %c0_i32_21 : i32
    scf.if %24 {
      %c0_22 = arith.constant 0 : index
      %c0_23 = arith.constant 0 : index
      %c0_24 = arith.constant 0 : index
      %25 = vector.load %arg7[%c0_22, %c0_23, %c0_24] : memref<2x16x32xf32, #tpu.memory_space<vmem>>, vector<1x16x32xf32>
      %26 = vector.shape_cast %25 : vector<1x16x32xf32> to vector<16x32xf32>
      %c0_25 = arith.constant 0 : index
      %c0_26 = arith.constant 0 : index
      %c0_27 = arith.constant 0 : index
      %27 = vector.load %arg5[%c0_25, %c0_26, %c0_27] : memref<2x1x32xf32, #tpu.memory_space<vmem>>, vector<1x1x32xf32>
      %28 = vector.shape_cast %27 : vector<1x1x32xf32> to vector<1x32xf32>
      %29 = vector.broadcast %28 : vector<1x32xf32> to vector<16x32xf32>
      %30 = arith.addf %26, %29 : vector<16x32xf32>
      %c1_28 = arith.constant 1 : index
      %c0_29 = arith.constant 0 : index
      %c0_30 = arith.constant 0 : index
      %31 = vector.load %arg7[%c1_28, %c0_29, %c0_30] : memref<2x16x32xf32, #tpu.memory_space<vmem>>, vector<1x16x32xf32>
      %32 = vector.shape_cast %31 : vector<1x16x32xf32> to vector<16x32xf32>
      %c1_31 = arith.constant 1 : index
      %c0_32 = arith.constant 0 : index
      %c0_33 = arith.constant 0 : index
      %33 = vector.load %arg5[%c1_31, %c0_32, %c0_33] : memref<2x1x32xf32, #tpu.memory_space<vmem>>, vector<1x1x32xf32>
      %34 = vector.shape_cast %33 : vector<1x1x32xf32> to vector<1x32xf32>
      %35 = vector.broadcast %34 : vector<1x32xf32> to vector<16x32xf32>
      %36 = arith.addf %32, %35 : vector<16x32xf32>
      %37 = arith.negf %36 : vector<16x32xf32>
      %38 = math.exp %37 : vector<16x32xf32>
      %cst_34 = arith.constant 1.000000e+00 : f32
      %39 = vector.broadcast %cst_34 : f32 to vector<16x32xf32>
      %40 = arith.addf %39, %38 : vector<16x32xf32>
      %41 = arith.divf %39, %40 : vector<16x32xf32>
      %42 = arith.mulf %30, %41 : vector<16x32xf32>
      %c0_35 = arith.constant 0 : index
      %c0_36 = arith.constant 0 : index
      %43 = vector.load %arg6[%c0_35, %c0_36] : memref<16x32xf32, #tpu.memory_space<vmem>>, vector<16x32xf32>
      tpu.vector_store %arg6[%c0_35, %c0_36], %42 {strides = array<i32>} : memref<16x32xf32, #tpu.memory_space<vmem>>, vector<16x32xf32>,
    } else {
    }
    return
  }
  func.func @transform_0(%arg0: i32, %arg1: i32, %arg2: i32) -> (i32, i32) {
    %c0_i32 = arith.constant 0 : i32
    return %arg0, %arg2 : i32, i32
  }
  func.func @transform_1(%arg0: i32, %arg1: i32, %arg2: i32) -> (i32, i32, i32) {
    %c0_i32 = arith.constant 0 : i32
    %c0_i32_0 = arith.constant 0 : i32
    return %c0_i32, %arg2, %arg1 : i32, i32, i32
  }
  func.func @transform_2(%arg0: i32, %arg1: i32, %arg2: i32) -> (i32, i32, i32) {
    %c0_i32 = arith.constant 0 : i32
    %c0_i32_0 = arith.constant 0 : i32
    %c0_i32_1 = arith.constant 0 : i32
    return %c0_i32, %c0_i32_0, %arg1 : i32, i32, i32
  }
  func.func @transform_3(%arg0: i32, %arg1: i32, %arg2: i32) -> (i32, i32) {
    %c0_i32 = arith.constant 0 : i32
    return %arg0, %arg1 : i32, i32
  }
}

</mosaic_0001>

<llo_original>
// kernel: tpu_custom_call.1
$region0: #{tpu_custom_call.1}
  #allocation0 [shape = 'u32[]', space=smem, size = 0x4, offset = 0x4, fixed_abs, tag = 'smem constant byte address 0x4 - core index']
  #allocation1 [shape = 'u32[144,128]{1,0:T(1,128)}', space=vmem, size = 0x12000, scoped, tag = 'internal scratch']
  #allocation2 [shape = 'f32[2,16,32]{2,1,0:T(8,128)}', space=vmem, size = 0x4000, scoped, tag = 'scratch operand']
  %s0 = inlined_call_operand.hbm [shape: bf16[16,32], index: 0, kind: input, shape index: {}]
  %s1 = inlined_call_operand.hbm [shape: bf16[2,32,32], index: 1, kind: input, shape index: {}]
  %s2 = inlined_call_operand.vmem [shape: f32[2,1,32], index: 2, kind: input, shape index: {}]
  %s3 = inlined_call_operand.hbm [shape: f32[16,32], index: 3, kind: output, shape index: {}]
  %s4 = sld [smem:[#allocation0]]
  $region38: #{tpu_custom_call.1} parent=0
    _
  %s6 = ssub.s32 1, %s4
  %s7 = scalar_select 0, %s6, %s4
  $region1: #{tpu_custom_call.1} parent=0
    #allocation3 [shape = 'u8[4096]{0}', space=vmem, size = 0x1000, scoped, tag = 'input window, operand 0, single buffered']
    #allocation4 [shape = 's32[1]{0}', space=sflag, size = 0x4, scoped, tag = 'scoped memory for tpu_custom_call.1']
    #allocation5 [shape = 's32[1]{0}', space=sflag, size = 0x4, scoped, tag = 'scoped memory for tpu_custom_call.1']
    #allocation6 [shape = 'u8[16384]{0}', space=vmem, size = 0x4000, scoped, tag = 'input window, operand 1, single buffered']
    #allocation7 [shape = 's32[1]{0}', space=sflag, size = 0x4, scoped, tag = 'scoped memory for tpu_custom_call.1']
    #allocation8 [shape = 'u8[8192]{0}', space=vmem, size = 0x2000, scoped, tag = 'output window, operand 0, single buffered']
    %8 = vsyncpa [#allocation4], 0
    %9 = vsyncpa [#allocation7], 0
    %10 = vsyncpa [#allocation5], 0
    // Predicated region
    $region2: #{tpu_custom_call.1} parent=1 // pred_check
      _
    $region3: #{tpu_custom_call.1} parent=1 // pred_check_branch
      %12 = sbr.rel (0) target = $region5
    $region4: #{tpu_custom_call.1} parent=1 // pred_region
      %s14 = ssub.s32 128, 128
      %15 = vsyncadd [#allocation4], %s14
      %s16 = sshll.u32 [#allocation3], 4
      %s17 = int_to_ptr.vmem [resolvable:$true] %s16
      %22 = dma.hbm_to_vmem [thread:$0]  %s0, 128, %s17, [#allocation4], 64, 64, 4
    $region5: #{tpu_custom_call.1} parent=1 // pred_fallthru
      _
    // Predicated region
    $region6: #{tpu_custom_call.1} parent=1 // pred_check
      _
    $region7: #{tpu_custom_call.1} parent=1 // pred_check_branch
      %24 = sbr.rel (0) target = $region9
    $region8: #{tpu_custom_call.1} parent=1 // pred_region
      %s26 = ssub.s32 512, 512
      %27 = vsyncadd [#allocation7], %s26
      %s28 = sshll.u32 [#allocation6], 4
      %s29 = int_to_ptr.vmem [resolvable:$true] %s28
      %34 = dma.hbm_to_vmem [thread:$0]  %s1, 512, %s29, [#allocation7], 64, 64, 4
    $region9: #{tpu_custom_call.1} parent=1 // pred_fallthru
      _
    // Predicated region
    $region10: #{tpu_custom_call.1} parent=1 // pred_check
      _
    $region11: #{tpu_custom_call.1} parent=1 // pred_check_branch
      %36 = sbr.rel (0) target = $region13
    $region12: #{tpu_custom_call.1} parent=1 // pred_region
      _
    $region13: #{tpu_custom_call.1} parent=1 // pred_fallthru
      _
    // Predicated region
    $region14: #{tpu_custom_call.1} parent=1 // pred_check
      _
    $region15: #{tpu_custom_call.1} parent=1 // pred_check_branch
      %38 = sbr.rel (0) target = $region17
    $region16: #{tpu_custom_call.1} parent=1 // pred_region
      %39 = dma.done [#allocation4], 128
    $region17: #{tpu_custom_call.1} parent=1 // pred_fallthru
      _
    // Predicated region
    $region18: #{tpu_custom_call.1} parent=1 // pred_check
      _
    $region19: #{tpu_custom_call.1} parent=1 // pred_check_branch
      %41 = sbr.rel (0) target = $region21
    $region20: #{tpu_custom_call.1} parent=1 // pred_region
      %42 = dma.done [#allocation7], 512
    $region21: #{tpu_custom_call.1} parent=1 // pred_fallthru
      _
    %p44 = scmp.eq.s32.totalorder 0, 0
    // Predicated region
    $region22: #{tpu_custom_call.1} parent=1 // pred_check
      %p45 = pneg %p44
    $region23: #{tpu_custom_call.1} parent=1 // pred_check_branch
      %47 = sbr.rel (%p45) target = $region25
    $region24: #{tpu_custom_call.1} parent=1 // pred_region
      %vm48 = vcmask 261120
      %49 = vst.msk [vmem:[#allocation2] sm:$0xff] %vm48, 0.0
      %50 = vst.msk [vmem:[#allocation2 + $0x8] sm:$0xff] %vm48, 0.0
      %51 = vst.msk [vmem:[#allocation2 + $0x10] sm:$0xff] %vm48, 0.0
      %52 = vst.msk [vmem:[#allocation2 + $0x18] sm:$0xff] %vm48, 0.0
    $region25: #{tpu_custom_call.1} parent=1 // pred_fallthru
      _
    %v53 = vld [vmem:[#allocation3] sm:$0xf]
    %v54 = vld [vmem:[#allocation3 + $0x4] sm:$0xf]
    %v55 = vld [vmem:[#allocation2] sm:$0xff]
    %v56 = vld [vmem:[#allocation2 + $0x8] sm:$0xff]
    %v57 = vld [vmem:[#allocation6] sm:$0xf]
    %v58 = vld [vmem:[#allocation6 + $0x4] sm:$0xf]
    %v59 = vld [vmem:[#allocation6 + $0x8] sm:$0xf]
    %v60 = vld [vmem:[#allocation6 + $0xc] sm:$0xf]
    %v63 = vunpack.c.l.b16 %v53
    %v64 = vunpack.c.l.b16 %v54
    %v65 = vpack.c.b16 %v64, %v63
    %v70 = vunpack.c.l.b16 %v57
    %v71 = vunpack.c.l.b16 %v58
    %v72 = vunpack.c.l.b16 %v59
    %v73 = vunpack.c.l.b16 %v60
    %v74 = vpack.c.b16 %v71, %v70
    %v75 = vpack.c.b16 %v73, %v72
    %vm78 = vcmask 261120
    %v80 = vsel %vm78, %v65, 0
    %82 = vmatprep.subr.bf16.mxu0 0
    %83 = vmatpush1.bf16.msra.mxu0 %v74
    %84 = vmatprep.subr.bf16.mxu0 0
    %85 = vmatpush1.bf16.msra.mxu0 %v75
    %86 = vmatprep.subr.bf16.mxu0 0
    %87 = vmatpush1.bf16.msra.mxu0 0
    %88 = vmatprep.subr.bf16.mxu0 0
    %89 = vmatpush1.bf16.msra.mxu0 0
    %90 = vmatprep.subr.bf16.mxu0 0
    %91 = vmatpush1.bf16.msra.mxu0 0
    %92 = vmatprep.subr.bf16.mxu0 0
    %93 = vmatpush1.bf16.msra.mxu0 0
    %94 = vmatprep.subr.bf16.mxu0 0
    %95 = vmatpush1.bf16.msra.mxu0 0
    %96 = vmatprep.subr.bf16.mxu0 0
    %97 = vmatpush1.bf16.msra.mxu0 0
    %98 = vmatprep.subr.bf16.mxu0 0
    %99 = vmatpush1.bf16.msra.mxu0 0
    %100 = vmatprep.subr.bf16.mxu0 0
    %101 = vmatpush1.bf16.msra.mxu0 0
    %102 = vmatprep.subr.bf16.mxu0 0
    %103 = vmatpush1.bf16.msra.mxu0 0
    %104 = vmatprep.subr.bf16.mxu0 0
    %105 = vmatpush1.bf16.msra.mxu0 0
    %106 = vmatprep.subr.bf16.mxu0 0
    %107 = vmatpush1.bf16.msra.mxu0 0
    %108 = vmatprep.subr.bf16.mxu0 0
    %109 = vmatpush1.bf16.msra.mxu0 0
    %110 = vmatprep.subr.bf16.mxu0 0
    %111 = vmatpush1.bf16.msra.mxu0 0
    %112 = vmatprep.subr.bf16.mxu0 0
    %113 = vmatpush1.bf16.msra.mxu0 0
    %114 = vmatprep.mubr.bf16.mxu0 0
    %115 = vmatmul.mubr.bf16.gmra.mrb[0].mxu0 %v80
    %v116 = vpop.f32.mrb[0].mxu0
    %v117 = vadd.f32 0.0, %v116
    %v118 = vpop.f32.mrb[0].mxu0
    %v119 = vpop.f32.mrb[0].mxu0
    %v120 = vadd.f32 0.0, %v119
    %v121 = vpop.f32.mrb[0].mxu0
    %122 = vdwg.mxu0
    %v123 = vadd.f32 %v55, %v117
    %v124 = vadd.f32 %v56, %v120
    %125 = vst.msk [vmem:[#allocation2] sm:$0xff] %vm78, %v123
    %126 = vst.msk [vmem:[#allocation2 + $0x8] sm:$0xff] %vm78, %v124
    %s127 = scalar_lea.vmem [#allocation2], 16
    %v128 = vld [vmem:[%s127] sm:$0xff]
    %v129 = vld [vmem:[%s127 + $0x8] sm:$0xff]
    %s130 = scalar_lea.vmem [#allocation6], 16
    %v131 = vld [vmem:[%s130] sm:$0xf]
    %v132 = vld [vmem:[%s130 + $0x4] sm:$0xf]
    %v133 = vld [vmem:[%s130 + $0x8] sm:$0xf]
    %v134 = vld [vmem:[%s130 + $0xc] sm:$0xf]
    %v139 = vunpack.c.l.b16 %v131
    %v140 = vunpack.c.l.b16 %v132
    %v141 = vunpack.c.l.b16 %v133
    %v142 = vunpack.c.l.b16 %v134
    %v143 = vpack.c.b16 %v140, %v139
    %v144 = vpack.c.b16 %v142, %v141
    %147 = vmatprep.subr.bf16.mxu0 0
    %148 = vmatpush1.bf16.msra.mxu0 %v143
    %149 = vmatprep.subr.bf16.mxu0 0
    %150 = vmatpush1.bf16.msra.mxu0 %v144
    %151 = vmatprep.subr.bf16.mxu0 0
    %152 = vmatpush1.bf16.msra.mxu0 0
    %153 = vmatprep.subr.bf16.mxu0 0
    %154 = vmatpush1.bf16.msra.mxu0 0
    %155 = vmatprep.subr.bf16.mxu0 0
    %156 = vmatpush1.bf16.msra.mxu0 0
    %157 = vmatprep.subr.bf16.mxu0 0
    %158 = vmatpush1.bf16.msra.mxu0 0
    %159 = vmatprep.subr.bf16.mxu0 0
    %160 = vmatpush1.bf16.msra.mxu0 0
    %161 = vmatprep.subr.bf16.mxu0 0
    %162 = vmatpush1.bf16.msra.mxu0 0
    %163 = vmatprep.subr.bf16.mxu0 0
    %164 = vmatpush1.bf16.msra.mxu0 0
    %165 = vmatprep.subr.bf16.mxu0 0
    %166 = vmatpush1.bf16.msra.mxu0 0
    %167 = vmatprep.subr.bf16.mxu0 0
    %168 = vmatpush1.bf16.msra.mxu0 0
    %169 = vmatprep.subr.bf16.mxu0 0
    %170 = vmatpush1.bf16.msra.mxu0 0
    %171 = vmatprep.subr.bf16.mxu0 0
    %172 = vmatpush1.bf16.msra.mxu0 0
    %173 = vmatprep.subr.bf16.mxu0 0
    %174 = vmatpush1.bf16.msra.mxu0 0
    %175 = vmatprep.subr.bf16.mxu0 0
    %176 = vmatpush1.bf16.msra.mxu0 0
    %177 = vmatprep.subr.bf16.mxu0 0
    %178 = vmatpush1.bf16.msra.mxu0 0
    %179 = vmatprep.mubr.bf16.mxu0 0
    %180 = vmatmul.mubr.bf16.gmra.mrb[0].mxu0 %v80
    %v181 = vpop.f32.mrb[0].mxu0
    %v182 = vadd.f32 0.0, %v181
    %v183 = vpop.f32.mrb[0].mxu0
    %v184 = vpop.f32.mrb[0].mxu0
    %v185 = vadd.f32 0.0, %v184
    %v186 = vpop.f32.mrb[0].mxu0
    %187 = vdwg.mxu0
    %v188 = vadd.f32 %v128, %v182
    %v189 = vadd.f32 %v129, %v185
    %190 = vst.msk [vmem:[%s127] sm:$0xff] %vm78, %v188
    %191 = vst.msk [vmem:[%s127 + $0x8] sm:$0xff] %vm78, %v189
    // Predicated region
    $region26: #{tpu_custom_call.1} parent=1 // pred_check
      %p192 = pneg %p44
    $region27: #{tpu_custom_call.1} parent=1 // pred_check_branch
      %194 = sbr.rel (%p192) target = $region29
    $region28: #{tpu_custom_call.1} parent=1 // pred_region
      %v195 = vld [vmem:[#allocation2] sm:$0xff]
      %v196 = vld [vmem:[#allocation2 + $0x8] sm:$0xff]
      %v197 = vld [vmem:[%s2] sm:$0x1]
      %v199 = vlaneseq
      %v200 = vshrl.u32 %v199, 7
      %v201 = vsub.s32 0, %v200
      %v202 = vrot.slane %v197, %v201
      %v204 = vadd.f32 %v195, %v202
      %v205 = vadd.f32 %v196, %v202
      %v206 = vld [vmem:[%s127] sm:$0xff]
      %v207 = vld [vmem:[%s127 + $0x8] sm:$0xff]
      %s208 = scalar_lea.vmem %s2, 1
      %v209 = vld [vmem:[%s208] sm:$0x1]
      %v211 = vlaneseq
      %v212 = vshrl.u32 %v211, 7
      %v213 = vsub.s32 0, %v212
      %v214 = vrot.slane %v209, %v213
      %v216 = vadd.f32 %v206, %v214
      %v217 = vadd.f32 %v207, %v214
      %v218 = vxor.u32 %v216, 2147483648
      %v219 = vxor.u32 %v217, 2147483648
      %v220 = vmul.f32 %v218, 1.442695
      %v221 = vpow.pop %v220
      %v222 = vmul.f32 %v219, 1.442695
      %v223 = vpow.pop %v222
      %v224 = vadd.f32 %v221, 1.0
      %v225 = vadd.f32 %v223, 1.0
      %v226 = vrcp.pop %v224
      %v227 = vmul.f32 1.0, %v226
      %v228 = vrcp.pop %v225
      %v229 = vmul.f32 1.0, %v228
      %v230 = vmul.f32 %v204, %v227
      %v231 = vmul.f32 %v205, %v229
      %232 = vst.msk [vmem:[#allocation8] sm:$0xff] %vm78, %v230
      %233 = vst.msk [vmem:[#allocation8 + $0x8] sm:$0xff] %vm78, %v231
    $region29: #{tpu_custom_call.1} parent=1 // pred_fallthru
      _
    // Predicated region
    $region30: #{tpu_custom_call.1} parent=1 // pred_check
      _
    $region31: #{tpu_custom_call.1} parent=1 // pred_check_branch
      %235 = sbr.rel (0) target = $region33
    $region32: #{tpu_custom_call.1} parent=1 // pred_region
      %s237 = ssub.s32 256, 256
      %238 = vsyncadd [#allocation5], %s237
      %s239 = sshll.u32 [#allocation8], 4
      %s240 = int_to_ptr.vmem [resolvable:$true] %s239
      %245 = dma.vmem_to_hbm [thread:$0]  %s240, 256, %s3, [#allocation5], 128, 128, 8
    $region33: #{tpu_custom_call.1} parent=1 // pred_fallthru
      _
    // Predicated region
    $region34: #{tpu_custom_call.1} parent=1 // pred_check
      _
    $region35: #{tpu_custom_call.1} parent=1 // pred_check_branch
      %247 = sbr.rel (0) target = $region37
    $region36: #{tpu_custom_call.1} parent=1 // pred_region
      %248 = dma.done [#allocation5], 256
    $region37: #{tpu_custom_call.1} parent=1 // pred_fallthru
      _
    %249 = vsyncpa [#allocation4], 1
    %250 = vsyncpa [#allocation7], 1
    %251 = vsyncpa [#allocation5], 1

</llo_original>
